<compile_context>
chip_gen: v6e
topology: v6e:2x2x1
jax: 0.10.0
libtpu: 0.0.40
codegen_flags: <defaults>
</compile_context>

<pallas_src>
import functools
import math

import jax
import jax.numpy as jnp
from jax import lax
from jax.experimental import pallas as pl
from jax.experimental.pallas import tpu as pltpu

_EPS = 1e-12  # F.normalize default eps


def _round_up(x, m):
    return ((x + m - 1) // m) * m


def _rotate_left(v, s):
    """result[..., i] = v[..., (i + s) % width]; s is a static Python int >= 1."""
    return jnp.concatenate([v[:, s:], v[:, :s]], axis=1)


def _sim_loss_kernel(x_ref, y_ref, o_ref, *, total_rows, tile_rows, seg_len, num_segs):
    # x_ref, y_ref: (tile_rows, W) tiles in VMEM; o_ref: (1, 8, 128) partial-sum slab.
    i = pl.program_id(0)

    x = x_ref[...].astype(jnp.float32)
    y = y_ref[...].astype(jnp.float32)

    dots = x * y
    sqs = x * x
    eps2 = jnp.float32(_EPS * _EPS)

    if num_segs > 1:
        # Packed path: row width == num_segs * seg_len == 128; segment j of a packed
        # row is original row (packed_row * num_segs + j). Segmented lane sums via a
        # log-tree of lane rotations: after the tree, lane j*seg_len of every row
        # holds sum(lanes[j*seg_len : (j+1)*seg_len]).
        shift = 1
        while shift < seg_len:
            dots = dots + _rotate_left(dots, shift)
            sqs = sqs + _rotate_left(sqs, shift)
            shift *= 2
        # rsqrt(max(sq, eps^2)) == 1 / max(||x||, eps)   (sqrt is monotone); EUP op.
        inv_norm = lax.rsqrt(jnp.maximum(sqs, eps2))
        loss = -dots * inv_norm                      # only lanes j*seg_len are meaningful
        lane = lax.broadcasted_iota(jnp.int32, loss.shape, 1)
        row = lax.broadcasted_iota(jnp.int32, loss.shape, 0) + i * tile_rows
        keep = ((lane & (seg_len - 1)) == 0) & (row < total_rows)
        loss = jnp.where(keep, loss, jnp.float32(0.0))   # select: drops NaN/Inf padding
    else:
        # Fallback path (D >= 128, or D/M do not admit packing).
        dot = jnp.sum(dots, axis=-1, keepdims=True)
        sq = jnp.sum(sqs, axis=-1, keepdims=True)
        inv_norm = lax.rsqrt(jnp.maximum(sq, eps2))
        loss = -dot * inv_norm
        row = lax.broadcasted_iota(jnp.int32, loss.shape, 0) + i * tile_rows
        loss = jnp.where(row < total_rows, loss, jnp.float32(0.0))

    partial = jnp.sum(loss)

    # Scalar partial -> element [0, 0] of the (8,128) slab, zeros elsewhere, so the
    # wrapper can do a plain jnp.sum over the whole output (no strided gather).
    sub = lax.broadcasted_iota(jnp.int32, o_ref.shape, 1)
    lanes = lax.broadcasted_iota(jnp.int32, o_ref.shape, 2)
    o_ref[...] = jnp.where((sub == 0) & (lanes == 0), partial, jnp.float32(0.0))


def _physical_vmem_bytes():
    try:
        return int(pltpu.get_tpu_info().vmem_capacity_bytes)
    except Exception:
        return 64 << 20  # conservative fallback (v7x per-TensorCore VMEM)


def simlilary_loss(feature_raw, feature_target, reduction="mean"):
    """Pallas TPU implementation of the PyTorch simlilary_loss forward."""
    assert feature_raw.shape == feature_target.shape
    if reduction != "mean":
        # TODO(synk): reduction='none'/'sum' (per-row loss output) not needed by the default path.
        raise NotImplementedError("only reduction='mean' implemented")

    orig_shape = feature_raw.shape
    D = int(orig_shape[-1])
    M = int(math.prod(orig_shape[:-1])) if len(orig_shape) > 1 else 1

    # Lane packing: g original rows per packed row when D evenly tiles the 128 lanes.
    g = 1
    if 0 < D < 128 and 128 % D == 0 and M % (128 // D) == 0:
        g = 128 // D
    # TODO(synk): M % (128//D) != 0 (would need a padded copy) and very large D
    # (D-chunked grid axis with VMEM accumulators) both fall back to the simple path.

    rows = M // g
    W = g * D

    x2 = feature_raw.reshape(rows, W)     # pure metadata reshape, keeps native dtype
    y2 = feature_target.reshape(rows, W)

    itemsize = jnp.dtype(feature_raw.dtype).itemsize
    pack_mult = 8 * max(1, 4 // itemsize)      # sublane packing: f32->8, bf16->16, int8->32
    padded_w = _round_up(W, 128)               # lane-padded row width in VMEM

    phys_vmem = _physical_vmem_bytes()
    if phys_vmem >= (96 << 20):                # v5e / v6e: 128 MiB physical VMEM
        f32_tile_target = 8 << 20              # f32-widened working set per input tile
        vmem_limit = 100 << 20
    else:                                      # v7x: 64 MiB per TensorCore
        f32_tile_target = 4 << 20
        vmem_limit = 56 << 20

    # Rows per tile from the f32-widened footprint (so bf16 inputs don't blow the
    # budget after the in-kernel upcast), rounded to the sublane packing.
    tm = max(pack_mult, (f32_tile_target // (padded_w * 4)) // pack_mult * pack_mult)
    # Aim for >= 8 grid steps when the row count allows, so v7x can split the
    # "parallel" axis across both TensorCores.
    min_tiles = 8
    tm = min(tm, max(pack_mult, _round_up((rows + min_tiles - 1) // min_tiles, pack_mult)))
    if tm > rows:
        tm = rows                              # full-extent block is always legal
    num_tiles = (rows + tm - 1) // tm

    cost = pl.CostEstimate(
        flops=4 * M * D,                       # x*y, x*x muls + adds
        transcendentals=M,                     # one rsqrt per row
        bytes_accessed=2 * M * D * itemsize + num_tiles * 8 * 128 * 4,
    )

    kernel = functools.partial(
        _sim_loss_kernel, total_rows=rows, tile_rows=tm, seg_len=D, num_segs=g)

    partials = pl.pallas_call(
        kernel,
        out_shape=jax.ShapeDtypeStruct((num_tiles, 8, 128), jnp.float32),
        grid_spec=pltpu.PrefetchScalarGridSpec(
            num_scalar_prefetch=0,
            grid=(num_tiles,),
            in_specs=[
                pl.BlockSpec((tm, W), lambda i: (i, 0)),
                pl.BlockSpec((tm, W), lambda i: (i, 0)),
            ],
            out_specs=pl.BlockSpec((1, 8, 128), lambda i: (i, 0, 0)),
        ),
        compiler_params=pltpu.CompilerParams(
            dimension_semantics=("parallel",),
            vmem_limit_bytes=vmem_limit,
        ),
        cost_estimate=cost,
    )(x2, y2)

    # Padded / masked rows contributed exactly 0; divide by the true row count.
    return jnp.sum(partials) / jnp.float32(M)


def _reference(feature_raw, feature_target):
    x = feature_raw.astype(jnp.float32)
    y = feature_target.astype(jnp.float32)
    norm = jnp.maximum(jnp.linalg.norm(x, axis=-1, keepdims=True), _EPS)
    return jnp.mean(-jnp.sum((x / norm) * y, axis=-1))


if __name__ == "__main__":
    key = jax.random.PRNGKey(0)
    k1, k2, k3, k4 = jax.random.split(key, 4)

    # Primary example: (batch=2, seq=8, hidden=32) -> lane-packed path (g=4).
    B, S, D = 2, 8, 32
    feature_raw = jax.random.normal(k1, (B, S, D), dtype=jnp.float32)
    feature_target = jax.random.normal(k2, (B, S, D), dtype=jnp.float32)

    loss = simlilary_loss(feature_raw, feature_target)
    loss = jax.block_until_ready(loss)
    ref = _reference(feature_raw, feature_target)
    assert jnp.allclose(loss, ref, atol=1e-5, rtol=1e-5), (loss, ref)

    # Secondary check: D that does not tile 128 lanes -> fallback path + remainder mask.
    xr = jax.random.normal(k3, (3, 5, 200), dtype=jnp.float32)
    xt = jax.random.normal(k4, (3, 5, 200), dtype=jnp.float32)
    loss2 = jax.block_until_ready(simlilary_loss(xr, xt))
    ref2 = _reference(xr, xt)
    assert jnp.allclose(loss2, ref2, atol=1e-5, rtol=1e-5), (loss2, ref2)

    print("KERNEL_OK")
</pallas_src>

<mosaic_0001>
module attributes {stable_mosaic.version = 11 : i64} {
  func.func @_sim_loss_kernel(%arg0: i32, %arg1: memref<4x128xf32, #tpu.memory_space<vmem>>, %arg2: memref<4x128xf32, #tpu.memory_space<vmem>>, %arg3: memref<1x8x128xf32, #tpu.memory_space<vmem>>) attributes {dimension_semantics = [#tpu.dimension_semantics<parallel>], iteration_bounds = array<i64: 1>, scalar_prefetch = 0 : i64, scratch_operands = 0 : i64, tpu.core_type = #tpu.core_type<tc>, window_params = [{transform_indices = @transform_0, window_bounds = array<i64: 4, 128>}, {transform_indices = @transform_1, window_bounds = array<i64: 4, 128>}, {transform_indices = @transform_2, window_bounds = array<i64: 1, 8, 128>}]} {
    %c0 = arith.constant 0 : index
    %c0_0 = arith.constant 0 : index
    %0 = vector.load %arg1[%c0, %c0_0] : memref<4x128xf32, #tpu.memory_space<vmem>>, vector<4x128xf32>
    %c0_1 = arith.constant 0 : index
    %c0_2 = arith.constant 0 : index
    %1 = vector.load %arg2[%c0_1, %c0_2] : memref<4x128xf32, #tpu.memory_space<vmem>>, vector<4x128xf32>
    %2 = arith.mulf %0, %1 : vector<4x128xf32>
    %3 = arith.mulf %0, %0 : vector<4x128xf32>
    %4 = vector.extract_strided_slice %2 {offsets = [0, 1], sizes = [4, 127], strides = [1, 1]} : vector<4x128xf32> to vector<4x127xf32>
    %5 = vector.extract_strided_slice %2 {offsets = [0, 0], sizes = [4, 1], strides = [1, 1]} : vector<4x128xf32> to vector<4x1xf32>
    %6 = tpu.concatenate %4, %5 in 1 : vector<4x127xf32>, vector<4x1xf32> -> vector<4x128xf32>
    %7 = arith.addf %2, %6 : vector<4x128xf32>
    %8 = vector.extract_strided_slice %3 {offsets = [0, 1], sizes = [4, 127], strides = [1, 1]} : vector<4x128xf32> to vector<4x127xf32>
    %9 = vector.extract_strided_slice %3 {offsets = [0, 0], sizes = [4, 1], strides = [1, 1]} : vector<4x128xf32> to vector<4x1xf32>
    %10 = tpu.concatenate %8, %9 in 1 : vector<4x127xf32>, vector<4x1xf32> -> vector<4x128xf32>
    %11 = arith.addf %3, %10 : vector<4x128xf32>
    %12 = vector.extract_strided_slice %7 {offsets = [0, 2], sizes = [4, 126], strides = [1, 1]} : vector<4x128xf32> to vector<4x126xf32>
    %13 = vector.extract_strided_slice %7 {offsets = [0, 0], sizes = [4, 2], strides = [1, 1]} : vector<4x128xf32> to vector<4x2xf32>
    %14 = tpu.concatenate %12, %13 in 1 : vector<4x126xf32>, vector<4x2xf32> -> vector<4x128xf32>
    %15 = arith.addf %7, %14 : vector<4x128xf32>
    %16 = vector.extract_strided_slice %11 {offsets = [0, 2], sizes = [4, 126], strides = [1, 1]} : vector<4x128xf32> to vector<4x126xf32>
    %17 = vector.extract_strided_slice %11 {offsets = [0, 0], sizes = [4, 2], strides = [1, 1]} : vector<4x128xf32> to vector<4x2xf32>
    %18 = tpu.concatenate %16, %17 in 1 : vector<4x126xf32>, vector<4x2xf32> -> vector<4x128xf32>
    %19 = arith.addf %11, %18 : vector<4x128xf32>
    %20 = vector.extract_strided_slice %15 {offsets = [0, 4], sizes = [4, 124], strides = [1, 1]} : vector<4x128xf32> to vector<4x124xf32>
    %21 = vector.extract_strided_slice %15 {offsets = [0, 0], sizes = [4, 4], strides = [1, 1]} : vector<4x128xf32> to vector<4x4xf32>
    %22 = tpu.concatenate %20, %21 in 1 : vector<4x124xf32>, vector<4x4xf32> -> vector<4x128xf32>
    %23 = arith.addf %15, %22 : vector<4x128xf32>
    %24 = vector.extract_strided_slice %19 {offsets = [0, 4], sizes = [4, 124], strides = [1, 1]} : vector<4x128xf32> to vector<4x124xf32>
    %25 = vector.extract_strided_slice %19 {offsets = [0, 0], sizes = [4, 4], strides = [1, 1]} : vector<4x128xf32> to vector<4x4xf32>
    %26 = tpu.concatenate %24, %25 in 1 : vector<4x124xf32>, vector<4x4xf32> -> vector<4x128xf32>
    %27 = arith.addf %19, %26 : vector<4x128xf32>
    %28 = vector.extract_strided_slice %23 {offsets = [0, 8], sizes = [4, 120], strides = [1, 1]} : vector<4x128xf32> to vector<4x120xf32>
    %29 = vector.extract_strided_slice %23 {offsets = [0, 0], sizes = [4, 8], strides = [1, 1]} : vector<4x128xf32> to vector<4x8xf32>
    %30 = tpu.concatenate %28, %29 in 1 : vector<4x120xf32>, vector<4x8xf32> -> vector<4x128xf32>
    %31 = arith.addf %23, %30 : vector<4x128xf32>
    %32 = vector.extract_strided_slice %27 {offsets = [0, 8], sizes = [4, 120], strides = [1, 1]} : vector<4x128xf32> to vector<4x120xf32>
    %33 = vector.extract_strided_slice %27 {offsets = [0, 0], sizes = [4, 8], strides = [1, 1]} : vector<4x128xf32> to vector<4x8xf32>
    %34 = tpu.concatenate %32, %33 in 1 : vector<4x120xf32>, vector<4x8xf32> -> vector<4x128xf32>
    %35 = arith.addf %27, %34 : vector<4x128xf32>
    %36 = vector.extract_strided_slice %31 {offsets = [0, 16], sizes = [4, 112], strides = [1, 1]} : vector<4x128xf32> to vector<4x112xf32>
    %37 = vector.extract_strided_slice %31 {offsets = [0, 0], sizes = [4, 16], strides = [1, 1]} : vector<4x128xf32> to vector<4x16xf32>
    %38 = tpu.concatenate %36, %37 in 1 : vector<4x112xf32>, vector<4x16xf32> -> vector<4x128xf32>
    %39 = arith.addf %31, %38 : vector<4x128xf32>
    %40 = vector.extract_strided_slice %35 {offsets = [0, 16], sizes = [4, 112], strides = [1, 1]} : vector<4x128xf32> to vector<4x112xf32>
    %41 = vector.extract_strided_slice %35 {offsets = [0, 0], sizes = [4, 16], strides = [1, 1]} : vector<4x128xf32> to vector<4x16xf32>
    %42 = tpu.concatenate %40, %41 in 1 : vector<4x112xf32>, vector<4x16xf32> -> vector<4x128xf32>
    %43 = arith.addf %35, %42 : vector<4x128xf32>
    %cst = arith.constant 1.000000e-24 : f32
    %44 = vector.broadcast %cst : f32 to vector<4x128xf32>
    %45 = arith.maximumf %43, %44 : vector<4x128xf32>
    %46 = math.rsqrt %45 : vector<4x128xf32>
    %cst_3 = arith.constant 0.000000e+00 : f32
    %47 = vector.broadcast %cst_3 : f32 to vector<4x128xf32>
    %48 = arith.subf %47, %39 : vector<4x128xf32>
    %49 = arith.mulf %48, %46 : vector<4x128xf32>
    %50 = tpu.iota {dimensions = array<i32: 1>} : vector<4x128xi32>
    %51 = tpu.iota {dimensions = array<i32: 0>} : vector<4x128xi32>
    %c4_i32 = arith.constant 4 : i32
    %52 = arith.muli %arg0, %c4_i32 : i32
    %53 = vector.broadcast %52 : i32 to vector<4x128xi32>
    %54 = arith.addi %51, %53 : vector<4x128xi32>
    %c31_i32 = arith.constant 31 : i32
    %55 = vector.broadcast %c31_i32 : i32 to vector<4x128xi32>
    %56 = arith.andi %50, %55 : vector<4x128xi32>
    %c0_i32 = arith.constant 0 : i32
    %57 = vector.broadcast %c0_i32 : i32 to vector<4x128xi32>
    %58 = arith.cmpi eq, %56, %57 : vector<4x128xi32>
    %c4_i32_4 = arith.constant 4 : i32
    %59 = vector.broadcast %c4_i32_4 : i32 to vector<4x128xi32>
    %60 = arith.cmpi slt, %54, %59 : vector<4x128xi32>
    %61 = arith.andi %58, %60 : vector<4x128xi1>
    %cst_5 = arith.constant 0.000000e+00 : f32
    %62 = vector.broadcast %cst_5 : f32 to vector<4x128xf32>
    %63 = arith.select %61, %49, %62 : vector<4x128xi1>, vector<4x128xf32>
    %64 = vector.shape_cast %63 : vector<4x128xf32> to vector<1x4x128xf32>
    %cst_6 = arith.constant dense<0.000000e+00> : vector<1xf32>
    %65 = vector.multi_reduction <add>, %64, %cst_6 [1, 2] : vector<1x4x128xf32> to vector<1xf32>
    %66 = vector.shape_cast %65 : vector<1xf32> to vector<1x1x1xf32>
    %67 = vector.extract %66[0, 0, 0] : f32 from vector<1x1x1xf32>
    %68 = tpu.iota {dimensions = array<i32: 1>} : vector<1x8x128xi32>
    %69 = tpu.iota {dimensions = array<i32: 2>} : vector<1x8x128xi32>
    %c0_i32_7 = arith.constant 0 : i32
    %70 = vector.broadcast %c0_i32_7 : i32 to vector<1x8x128xi32>
    %71 = arith.cmpi eq, %68, %70 : vector<1x8x128xi32>
    %c0_i32_8 = arith.constant 0 : i32
    %72 = vector.broadcast %c0_i32_8 : i32 to vector<1x8x128xi32>
    %73 = arith.cmpi eq, %69, %72 : vector<1x8x128xi32>
    %74 = arith.andi %71, %73 : vector<1x8x128xi1>
    %cst_9 = arith.constant 0.000000e+00 : f32
    %75 = vector.broadcast %67 : f32 to vector<1x8x128xf32>
    %76 = vector.broadcast %cst_9 : f32 to vector<1x8x128xf32>
    %77 = arith.select %74, %75, %76 : vector<1x8x128xi1>, vector<1x8x128xf32>
    %c0_10 = arith.constant 0 : index
    %c0_11 = arith.constant 0 : index
    %c0_12 = arith.constant 0 : index
    %78 = vector.load %arg3[%c0_10, %c0_11, %c0_12] : memref<1x8x128xf32, #tpu.memory_space<vmem>>, vector<1x8x128xf32>
    tpu.vector_store %arg3[%c0_10, %c0_11, %c0_12], %77 {strides = array<i32>} : memref<1x8x128xf32, #tpu.memory_space<vmem>>, vector<1x8x128xf32>,
    return
  }
  func.func @transform_0(%arg0: i32) -> (i32, i32) {
    %c0_i32 = arith.constant 0 : i32
    %c0_i32_0 = arith.constant 0 : i32
    return %arg0, %c0_i32 : i32, i32
  }
  func.func @transform_1(%arg0: i32) -> (i32, i32) {
    %c0_i32 = arith.constant 0 : i32
    %c0_i32_0 = arith.constant 0 : i32
    return %arg0, %c0_i32 : i32, i32
  }
  func.func @transform_2(%arg0: i32) -> (i32, i32, i32) {
    %c0_i32 = arith.constant 0 : i32
    %c0_i32_0 = arith.constant 0 : i32
    %c0_i32_1 = arith.constant 0 : i32
    return %arg0, %c0_i32, %c0_i32_0 : i32, i32, i32
  }
}

</mosaic_0001>

<llo_original>
// kernel: tpu_custom_call.1
$region0: #{tpu_custom_call.1}
  #allocation0 [shape = 'u32[]', space=smem, size = 0x4, offset = 0x4, fixed_abs, tag = 'smem constant byte address 0x4 - core index']
  #allocation1 [shape = 'u32[144,128]{1,0:T(1,128)}', space=vmem, size = 0x12000, scoped, tag = 'internal scratch']
  %s0 = inlined_call_operand.hbm [shape: f32[4,128], index: 0, kind: input, shape index: {}]
  %s1 = inlined_call_operand.hbm [shape: f32[4,128], index: 1, kind: input, shape index: {}]
  %s2 = inlined_call_operand.hbm [shape: f32[1,8,128], index: 2, kind: output, shape index: {}]
  %s3 = sld [smem:[#allocation0]]
  $region26: #{tpu_custom_call.1} parent=0
    _
  %s5 = ssub.s32 1, %s3
  %s6 = scalar_select 0, %s5, %s3
  $region1: #{tpu_custom_call.1} parent=0
    #allocation2 [shape = 'u8[2048]{0}', space=vmem, size = 0x800, scoped, tag = 'input window, operand 0, single buffered']
    #allocation3 [shape = 's32[1]{0}', space=sflag, size = 0x4, scoped, tag = 'scoped memory for tpu_custom_call.1']
    #allocation4 [shape = 's32[1]{0}', space=sflag, size = 0x4, scoped, tag = 'scoped memory for tpu_custom_call.1']
    #allocation5 [shape = 'u8[2048]{0}', space=vmem, size = 0x800, scoped, tag = 'input window, operand 1, single buffered']
    #allocation6 [shape = 's32[1]{0}', space=sflag, size = 0x4, scoped, tag = 'scoped memory for tpu_custom_call.1']
    #allocation7 [shape = 'u8[4096]{0}', space=vmem, size = 0x1000, scoped, tag = 'output window, operand 0, single buffered']
    %7 = vsyncpa [#allocation3], 0
    %8 = vsyncpa [#allocation6], 0
    %9 = vsyncpa [#allocation4], 0
    // Predicated region
    $region2: #{tpu_custom_call.1} parent=1 // pred_check
      _
    $region3: #{tpu_custom_call.1} parent=1 // pred_check_branch
      %11 = sbr.rel (0) target = $region5
    $region4: #{tpu_custom_call.1} parent=1 // pred_region
      %s13 = ssub.s32 64, 64
      %14 = vsyncadd [#allocation3], %s13
      %s16 = sshll.u32 [#allocation2], 4
      %s17 = int_to_ptr.vmem [resolvable:$true] %s16
      %19 = dma.hbm_to_vmem [thread:$0]  %s0, 64, %s17, [#allocation3]
    $region5: #{tpu_custom_call.1} parent=1 // pred_fallthru
      _
    // Predicated region
    $region6: #{tpu_custom_call.1} parent=1 // pred_check
      _
    $region7: #{tpu_custom_call.1} parent=1 // pred_check_branch
      %21 = sbr.rel (0) target = $region9
    $region8: #{tpu_custom_call.1} parent=1 // pred_region
      %s23 = ssub.s32 64, 64
      %24 = vsyncadd [#allocation6], %s23
      %s26 = sshll.u32 [#allocation5], 4
      %s27 = int_to_ptr.vmem [resolvable:$true] %s26
      %29 = dma.hbm_to_vmem [thread:$0]  %s1, 64, %s27, [#allocation6]
    $region9: #{tpu_custom_call.1} parent=1 // pred_fallthru
      _
    // Predicated region
    $region10: #{tpu_custom_call.1} parent=1 // pred_check
      _
    $region11: #{tpu_custom_call.1} parent=1 // pred_check_branch
      %31 = sbr.rel (0) target = $region13
    $region12: #{tpu_custom_call.1} parent=1 // pred_region
      %32 = dma.done [#allocation3], 64
    $region13: #{tpu_custom_call.1} parent=1 // pred_fallthru
      _
    // Predicated region
    $region14: #{tpu_custom_call.1} parent=1 // pred_check
      _
    $region15: #{tpu_custom_call.1} parent=1 // pred_check_branch
      %34 = sbr.rel (0) target = $region17
    $region16: #{tpu_custom_call.1} parent=1 // pred_region
      %35 = dma.done [#allocation6], 64
    $region17: #{tpu_custom_call.1} parent=1 // pred_fallthru
      _
    %v36 = vld [vmem:[#allocation2] sm:$0xf]
    %v37 = vld [vmem:[#allocation5] sm:$0xf]
    %v38 = vmul.f32 %v36, %v37
    %v39 = vmul.f32 %v36, %v36
    %41 = vrot.lane.b32.xlu0 %v38, 127
    %v42 = vpop.permute.xlu0 %41
    %v44 = vadd.f32 %v38, %v42
    %46 = vrot.lane.b32.xlu0 %v39, 127
    %v47 = vpop.permute.xlu0 %46
    %v49 = vadd.f32 %v39, %v47
    %51 = vrot.lane.b32.xlu0 %v44, 126
    %v52 = vpop.permute.xlu0 %51
    %v54 = vadd.f32 %v44, %v52
    %56 = vrot.lane.b32.xlu0 %v49, 126
    %v57 = vpop.permute.xlu0 %56
    %v59 = vadd.f32 %v49, %v57
    %61 = vrot.lane.b32.xlu0 %v54, 124
    %v62 = vpop.permute.xlu0 %61
    %v64 = vadd.f32 %v54, %v62
    %66 = vrot.lane.b32.xlu0 %v59, 124
    %v67 = vpop.permute.xlu0 %66
    %v69 = vadd.f32 %v59, %v67
    %71 = vrot.lane.b32.xlu0 %v64, 120
    %v72 = vpop.permute.xlu0 %71
    %v74 = vadd.f32 %v64, %v72
    %76 = vrot.lane.b32.xlu0 %v69, 120
    %v77 = vpop.permute.xlu0 %76
    %v79 = vadd.f32 %v69, %v77
    %81 = vrot.lane.b32.xlu0 %v74, 112
    %v82 = vpop.permute.xlu0 %81
    %v84 = vadd.f32 %v74, %v82
    %86 = vrot.lane.b32.xlu0 %v79, 112
    %v87 = vpop.permute.xlu0 %86
    %v89 = vadd.f32 %v79, %v87
    %v90 = vmax.f32 %v89, 1e-24
    %v91 = vrsqrt.pop %v90
    %v92 = vsub.f32 0.0, %v84
    %v93 = vmul.f32 %v92, %v91
    %v94 = vlaneseq
    %v95 = vand.u32 %v94, 127
    %v96 = vlaneseq
    %v97 = vshrl.u32 %v96, 7
    %s98 = smul.u32 0, 4
    %v99 = vstv %s98
    %v100 = vadd.s32 %v97, %v99
    %v101 = vand.u32 %v95, 31
    %vm102 = vcmp.eq.s32.totalorder %v101, 0
    %vm103 = vcmp.lt.s32.totalorder %v100, 4
    %vm104 = vmand %vm102, %vm103
    %v105 = vsel %vm104, %v93, 0.0
    %vm106 = vcmask 1043456
    %v107 = vsel %vm106, %v105, 0.0
    %108 = vadd.xlane.f32.xlu0 %v107
    %v109 = vpop.xlane.xlu0 %108
    %v110 = vrot.slane %v109, 4
    %v111 = vadd.f32 %v109, %v110
    %v112 = vrot.slane %v111, 2
    %v113 = vadd.f32 %v111, %v112
    %v114 = vrot.slane %v113, 1
    %v115 = vadd.f32 %v113, %v114
    %s116 = vtos %v115
    %vm117 = vcmp.eq.s32.totalorder %v97, 0
    %vm118 = vcmp.eq.s32.totalorder %v95, 0
    %vm119 = vmand %vm117, %vm118
    %v120 = vstv %s116
    %v121 = vsel %vm119, %v120, 0.0
    %122 = vst [vmem:[#allocation7] sm:$0xff] %v121
    // Predicated region
    $region18: #{tpu_custom_call.1} parent=1 // pred_check
      _
    $region19: #{tpu_custom_call.1} parent=1 // pred_check_branch
      %124 = sbr.rel (0) target = $region21
    $region20: #{tpu_custom_call.1} parent=1 // pred_region
      %s126 = ssub.s32 128, 128
      %127 = vsyncadd [#allocation4], %s126
      %s129 = sshll.u32 [#allocation7], 4
      %s130 = int_to_ptr.vmem [resolvable:$true] %s129
      %132 = dma.vmem_to_hbm [thread:$0]  %s130, 128, %s2, [#allocation4]
    $region21: #{tpu_custom_call.1} parent=1 // pred_fallthru
      _
    // Predicated region
    $region22: #{tpu_custom_call.1} parent=1 // pred_check
      _
    $region23: #{tpu_custom_call.1} parent=1 // pred_check_branch
      %134 = sbr.rel (0) target = $region25
    $region24: #{tpu_custom_call.1} parent=1 // pred_region
      %135 = dma.done [#allocation4], 128
    $region25: #{tpu_custom_call.1} parent=1 // pred_fallthru
      _
    %136 = vsyncpa [#allocation3], 1
    %137 = vsyncpa [#allocation6], 1
    %138 = vsyncpa [#allocation4], 1

</llo_original>
